<compile_context>
chip_gen: v5e
topology: v5e:2x2
jax: 0.10.0
libtpu: 0.0.40
codegen_flags: <defaults>
</compile_context>

<pallas_src>
import math
import functools
import jax
import jax.numpy as jnp
from jax.experimental import pallas as pl
from jax.experimental.pallas import tpu as pltpu


_ROW_TILE_CAP = 2048            # v7x-safe: 2048x2048 bf16 adj double-buffer = 16 MiB
_SUPPORT_K_TILE = 512           # K tile for standalone x @ W1 (large-nfeat path)
_FUSE_FEAT_MAX = 256            # fuse feat @ W into the aggregate when width <= this
_VMEM_LIMIT = 48 * 1024 * 1024  # < v7x 64 MiB physical; ample headroom on v5e/v6e


def _round_up(x, m):
    return ((x + m - 1) // m) * m


def _pad_cast(a, rows, cols, dtype):
    # Skip pad / cast when they are no-ops so pre-aligned, pre-cast caller
    # inputs (recommended for adj) don't pay an extra wrapper-side HBM pass.
    if a.shape != (rows, cols):
        a = jnp.pad(a, ((0, rows - a.shape[0]), (0, cols - a.shape[1])))
    if a.dtype != dtype:
        a = a.astype(dtype)
    return a


# ----------------- support = x @ W (standalone, K-tiled, large nfeat) --------
def _support_kernel(x_ref, w_ref, out_ref, acc_ref):
    kf = pl.program_id(1)

    @pl.when(kf == 0)
    def _():
        acc_ref[...] = jnp.zeros_like(acc_ref)

    acc_ref[...] += jnp.dot(
        x_ref[...], w_ref[...], preferred_element_type=jnp.float32
    )

    @pl.when(kf == pl.num_programs(1) - 1)
    def _():
        out_ref[...] = acc_ref[...].astype(out_ref.dtype)


def _support_matmul(x_bf16, w_bf16, tm, tkf):
    n_p, f_in = x_bf16.shape
    f_out = w_bf16.shape[1]
    return pl.pallas_call(
        _support_kernel,
        out_shape=jax.ShapeDtypeStruct((n_p, f_out), jnp.bfloat16),
        grid_spec=pltpu.PrefetchScalarGridSpec(
            num_scalar_prefetch=0,
            grid=(n_p // tm, f_in // tkf),          # reduction axis last
            in_specs=[
                pl.BlockSpec((tm, tkf), lambda i, kf: (i, kf)),
                pl.BlockSpec((tkf, f_out), lambda i, kf: (kf, 0)),
            ],
            out_specs=pl.BlockSpec((tm, f_out), lambda i, kf: (i, 0)),
            scratch_shapes=[pltpu.VMEM((tm, f_out), jnp.float32)],
        ),
        compiler_params=pltpu.CompilerParams(
            dimension_semantics=("parallel", "arbitrary"),
            vmem_limit_bytes=_VMEM_LIMIT,
        ),
    )(x_bf16, w_bf16)


# -------- out = activation(adj @ (feat [@ W]) + bias), tiled over (rows, k) ---
def _aggregate_kernel(adj_ref, feat_ref, *rest, activation, n_valid_cols, fuse_w):
    if fuse_w:
        w_ref, b_ref, out_ref, acc_ref = rest
    else:
        b_ref, out_ref, acc_ref = rest

    k = pl.program_id(1)

    @pl.when(k == 0)
    def _():
        acc_ref[...] = jnp.zeros_like(acc_ref)

    if fuse_w:
        # Recompute the support tile in-kernel; W is VMEM-resident across steps.
        s = jnp.dot(
            feat_ref[...], w_ref[...], preferred_element_type=jnp.float32
        ).astype(jnp.bfloat16)
    else:
        s = feat_ref[...]

    # bf16 x bf16 -> f32 accumulator (MXU-native)
    acc_ref[...] += jnp.dot(adj_ref[...], s, preferred_element_type=jnp.float32)

    @pl.when(k == pl.num_programs(1) - 1)
    def _():
        z = acc_ref[...] + b_ref[...]  # bias broadcast (1, f_out) -> (tm, f_out)
        if activation == "relu":
            out_ref[...] = jnp.maximum(z, 0.0).astype(out_ref.dtype)
        else:  # masked, numerically stable log_softmax over valid class columns
            col = jax.lax.broadcasted_iota(jnp.int32, z.shape, 1)
            valid = col < n_valid_cols
            zm = jnp.where(valid, z, jnp.float32(-1e30))
            m = jnp.max(zm, axis=1, keepdims=True)
            sh = zm - m
            lse = jnp.log(jnp.sum(jnp.exp(sh), axis=1, keepdims=True))
            out_ref[...] = (sh - lse).astype(out_ref.dtype)


def _aggregate(adj_bf16, feat_bf16, bias_f32, w_bf16=None, *, activation,
               n_valid_cols, out_dtype, tm, tk):
    # TODO(synk): block-sparse skipping of zero adjacency tiles via
    # PrefetchScalarGridSpec(num_scalar_prefetch=1) + data-dependent index_map
    # (largest remaining win for realistic 1-10% dense graphs).
    n_p = adj_bf16.shape[0]
    f_feat = feat_bf16.shape[1]
    f_out = bias_f32.shape[1]
    fuse_w = w_bf16 is not None

    kernel = functools.partial(
        _aggregate_kernel, activation=activation,
        n_valid_cols=n_valid_cols, fuse_w=fuse_w,
    )

    in_specs = [
        pl.BlockSpec((tm, tk), lambda i, k: (i, k)),        # adj tile
        pl.BlockSpec((tk, f_feat), lambda i, k: (k, 0)),    # feat / support tile
    ]
    args = [adj_bf16, feat_bf16]
    if fuse_w:
        in_specs.append(pl.BlockSpec(w_bf16.shape, lambda i, k: (0, 0)))  # W resident
        args.append(w_bf16)
    in_specs.append(pl.BlockSpec((1, f_out), lambda i, k: (0, 0)))        # bias
    args.append(bias_f32)

    return pl.pallas_call(
        kernel,
        out_shape=jax.ShapeDtypeStruct((n_p, f_out), out_dtype),
        grid_spec=pltpu.PrefetchScalarGridSpec(
            num_scalar_prefetch=0,
            grid=(n_p // tm, n_p // tk),  # reduction axis last
            in_specs=in_specs,
            out_specs=pl.BlockSpec((tm, f_out), lambda i, k: (i, 0)),
            scratch_shapes=[pltpu.VMEM((tm, f_out), jnp.float32)],
        ),
        compiler_params=pltpu.CompilerParams(
            dimension_semantics=("parallel", "arbitrary"),
            vmem_limit_bytes=_VMEM_LIMIT,
        ),
    )(*args)


# ------------------------------ full forward ---------------------------------
def gcn_forward(x, adj, w1, b1, w2, b2):
    n, nfeat = x.shape
    nhid = w1.shape[1]
    nclass = w2.shape[1]

    # Lane-dense padded feature/class dims (multiples of 128).
    nfeat_p = _round_up(nfeat, 128)
    nhid_p = _round_up(nhid, 128)
    nclass_p = _round_up(nclass, 128)

    # Standalone support matmul K tile (only used on the large-nfeat path).
    if nfeat_p <= _SUPPORT_K_TILE:
        tkf = nfeat_p
    else:
        tkf = _SUPPORT_K_TILE
        nfeat_p = _round_up(nfeat_p, tkf)

    # Row/reduction tiling over the node dimension: lane-dense (multiple of 128),
    # >= 2 row blocks whenever possible (v7x megacore), cap 2048 (v7x VMEM).
    n128 = _round_up(n, 128)
    if n128 <= 128:
        tm = 128
    elif n128 <= 2 * _ROW_TILE_CAP:
        tm = _round_up(-(-n128 // 2), 128)   # ~half the rows, 128-aligned
    else:
        tm = _ROW_TILE_CAP
    n_p = _round_up(n128, tm)
    tk = tm

    # Zero-padding is numerically inert (zero adj cols/rows, zero weight rows/cols).
    x_p = _pad_cast(x, n_p, nfeat_p, jnp.bfloat16)
    adj_p = _pad_cast(adj, n_p, n_p, jnp.bfloat16)   # single cast, reused by both layers
    w1_p = _pad_cast(w1, nfeat_p, nhid_p, jnp.bfloat16)
    w2_p = _pad_cast(w2, nhid_p, nclass_p, jnp.bfloat16)
    b1_p = _pad_cast(b1.reshape(1, -1), 1, nhid_p, jnp.float32)
    b2_p = _pad_cast(b2.reshape(1, -1), 1, nclass_p, jnp.float32)

    # --- layer 1: h = relu(adj @ (x @ W1) + b1), bias+ReLU fused in finalize ---
    if nfeat_p <= _FUSE_FEAT_MAX:
        # Fused: x @ W1 recomputed per reduction block, W1 resident in VMEM.
        h = _aggregate(adj_p, x_p, b1_p, w1_p, activation="relu",
                       n_valid_cols=nhid, out_dtype=jnp.bfloat16, tm=tm, tk=tk)
    else:
        # Large nfeat: standalone K-tiled support matmul, then unfused aggregate.
        s1 = _support_matmul(x_p, w1_p, tm, tkf)
        h = _aggregate(adj_p, s1, b1_p, None, activation="relu",
                       n_valid_cols=nhid, out_dtype=jnp.bfloat16, tm=tm, tk=tk)

    # TODO(synk): F.dropout with training=True is stochastic; eval-mode
    # (identity) semantics are implemented here.

    # --- layer 2: out = log_softmax(adj @ (h @ W2) + b2, axis=1), fused -------
    z = _aggregate(adj_p, h, b2_p, w2_p, activation="log_softmax",
                   n_valid_cols=nclass, out_dtype=jnp.float32, tm=tm, tk=tk)

    # Slice padded rows / classes back off (lane-dense compute, exact output shape).
    return z[:n, :nclass]


def init_gc_params(key, in_features, out_features):
    # Mirrors GraphConvolution.reset_parameters: U(-stdv, stdv), stdv=1/sqrt(out)
    stdv = 1.0 / math.sqrt(out_features)
    kw, kb = jax.random.split(key)
    w = jax.random.uniform(kw, (in_features, out_features), jnp.float32, -stdv, stdv)
    b = jax.random.uniform(kb, (out_features,), jnp.float32, -stdv, stdv)
    return w, b


def _make_inputs(key, n, nfeat, nhid, nclass):
    kx, kadj, k1, k2 = jax.random.split(key, 4)
    x = jax.random.normal(kx, (n, nfeat), jnp.float32)
    # Symmetric row-normalized adjacency with self-loops (typical GCN input)
    a = (jax.random.uniform(kadj, (n, n)) < 0.1).astype(jnp.float32)
    a = jnp.maximum(a, a.T) + jnp.eye(n, dtype=jnp.float32)
    adj = a / jnp.sum(a, axis=1, keepdims=True)
    w1, b1 = init_gc_params(k1, nfeat, nhid)
    w2, b2 = init_gc_params(k2, nhid, nclass)
    return x, adj, w1, b1, w2, b2


def _reference(x, adj, w1, b1, w2, b2):
    h_ref = jnp.maximum(adj @ (x @ w1) + b1, 0.0)
    z_ref = adj @ (h_ref @ w2) + b2
    return jax.nn.log_softmax(z_ref, axis=1)


if __name__ == "__main__":
    gcn = jax.jit(gcn_forward)
    key = jax.random.PRNGKey(0)
    k_small, k_large = jax.random.split(key)

    # --- test 1: small shapes, fused layer-1 path, single row block ----------
    N, nfeat, nhid, nclass = 64, 32, 32, 16
    args = _make_inputs(k_small, N, nfeat, nhid, nclass)
    out = jax.block_until_ready(gcn(*args))
    ref = _reference(*args)
    assert out.shape == (N, nclass)
    assert bool(jnp.all(jnp.abs(jnp.sum(jnp.exp(out), axis=1) - 1.0) < 1e-3))
    # bf16 MXU inputs with f32 accumulation: loose-but-meaningful tolerance.
    assert bool(jnp.max(jnp.abs(out - ref)) < 5e-2)

    # --- test 2: Cora-like shapes, K-tiled support path, 2 row blocks --------
    N, nfeat, nhid, nclass = 200, 600, 64, 7
    args = _make_inputs(k_large, N, nfeat, nhid, nclass)
    out = jax.block_until_ready(gcn(*args))
    ref = _reference(*args)
    assert out.shape == (N, nclass)
    assert bool(jnp.all(jnp.abs(jnp.sum(jnp.exp(out), axis=1) - 1.0) < 1e-3))
    assert bool(jnp.max(jnp.abs(out - ref)) < 1e-1)

    print("KERNEL_OK")
</pallas_src>

<mosaic_0001>
module attributes {stable_mosaic.version = 11 : i64} {
  func.func @_aggregate_kernel(%arg0: i32, %arg1: i32, %arg2: memref<128x128xbf16, #tpu.memory_space<vmem>>, %arg3: memref<128x128xbf16, #tpu.memory_space<vmem>>, %arg4: memref<128x128xbf16, #tpu.memory_space<vmem>>, %arg5: memref<1x128xf32, #tpu.memory_space<vmem>>, %arg6: memref<128x128xf32, #tpu.memory_space<vmem>>, %arg7: memref<128x128xf32, #tpu.memory_space<vmem>>) attributes {dimension_semantics = [#tpu.dimension_semantics<parallel>, #tpu.dimension_semantics<arbitrary>], iteration_bounds = array<i64: 1, 1>, scalar_prefetch = 0 : i64, scratch_operands = 1 : i64, tpu.core_type = #tpu.core_type<tc>, window_params = [{transform_indices = @transform_0, window_bounds = array<i64: 128, 128>}, {transform_indices = @transform_1, window_bounds = array<i64: 128, 128>}, {pipeline_mode = #tpu.pipeline_mode<synchronous>, transform_indices = @transform_2, window_bounds = array<i64: 128, 128>}, {pipeline_mode = #tpu.pipeline_mode<synchronous>, transform_indices = @transform_3, window_bounds = array<i64: 1, 128>}, {transform_indices = @transform_4, window_bounds = array<i64: 128, 128>}]} {
    %c0_i32 = arith.constant 0 : i32
    %0 = arith.cmpi eq, %arg1, %c0_i32 : i32
    %1 = arith.extui %0 : i1 to i32
    %c0_i32_0 = arith.constant 0 : i32
    %2 = arith.cmpi ne, %1, %c0_i32_0 : i32
    scf.if %2 {
      %cst_13 = arith.constant 0.000000e+00 : f32
      %15 = vector.broadcast %cst_13 : f32 to vector<128x128xf32>
      %c0_14 = arith.constant 0 : index
      %c0_15 = arith.constant 0 : index
      %16 = vector.load %arg7[%c0_14, %c0_15] : memref<128x128xf32, #tpu.memory_space<vmem>>, vector<128x128xf32>
      tpu.vector_store %arg7[%c0_14, %c0_15], %15 {strides = array<i32>} : memref<128x128xf32, #tpu.memory_space<vmem>>, vector<128x128xf32>,
    } else {
    }
    %c0 = arith.constant 0 : index
    %c0_1 = arith.constant 0 : index
    %3 = vector.load %arg3[%c0, %c0_1] : memref<128x128xbf16, #tpu.memory_space<vmem>>, vector<128x128xbf16>
    %c0_2 = arith.constant 0 : index
    %c0_3 = arith.constant 0 : index
    %4 = vector.load %arg4[%c0_2, %c0_3] : memref<128x128xbf16, #tpu.memory_space<vmem>>, vector<128x128xbf16>
    %cst = arith.constant dense<0.000000e+00> : vector<128x128xf32>
    %5 = tpu.matmul %3, %4, %cst {dimension_numbers = #tpu.dot_dimension_numbers<[1], [0], [0], [1], [0, 0, 1, 1], [], []>} : vector<128x128xbf16>, vector<128x128xbf16>, vector<128x128xf32> -> vector<128x128xf32>
    %6 = arith.truncf %5 : vector<128x128xf32> to vector<128x128xbf16>
    %c0_4 = arith.constant 0 : index
    %c0_5 = arith.constant 0 : index
    %7 = vector.load %arg7[%c0_4, %c0_5] : memref<128x128xf32, #tpu.memory_space<vmem>>, vector<128x128xf32>
    %c0_6 = arith.constant 0 : index
    %c0_7 = arith.constant 0 : index
    %8 = vector.load %arg2[%c0_6, %c0_7] : memref<128x128xbf16, #tpu.memory_space<vmem>>, vector<128x128xbf16>
    %cst_8 = arith.constant dense<0.000000e+00> : vector<128x128xf32>
    %9 = tpu.matmul %8, %6, %cst_8 {dimension_numbers = #tpu.dot_dimension_numbers<[1], [0], [0], [1], [0, 0, 1, 1], [], []>} : vector<128x128xbf16>, vector<128x128xbf16>, vector<128x128xf32> -> vector<128x128xf32>
    %10 = arith.addf %7, %9 : vector<128x128xf32>
    %c0_9 = arith.constant 0 : index
    %c0_10 = arith.constant 0 : index
    %11 = vector.load %arg7[%c0_9, %c0_10] : memref<128x128xf32, #tpu.memory_space<vmem>>, vector<128x128xf32>
    tpu.vector_store %arg7[%c0_9, %c0_10], %10 {strides = array<i32>} : memref<128x128xf32, #tpu.memory_space<vmem>>, vector<128x128xf32>,
    %c0_i32_11 = arith.constant 0 : i32
    %12 = arith.cmpi eq, %arg1, %c0_i32_11 : i32
    %13 = arith.extui %12 : i1 to i32
    %c0_i32_12 = arith.constant 0 : i32
    %14 = arith.cmpi ne, %13, %c0_i32_12 : i32
    scf.if %14 {
      %c0_13 = arith.constant 0 : index
      %c0_14 = arith.constant 0 : index
      %15 = vector.load %arg7[%c0_13, %c0_14] : memref<128x128xf32, #tpu.memory_space<vmem>>, vector<128x128xf32>
      %c0_15 = arith.constant 0 : index
      %c0_16 = arith.constant 0 : index
      %16 = vector.load %arg5[%c0_15, %c0_16] : memref<1x128xf32, #tpu.memory_space<vmem>>, vector<1x128xf32>
      %17 = vector.broadcast %16 : vector<1x128xf32> to vector<128x128xf32>
      %18 = arith.addf %15, %17 : vector<128x128xf32>
      %19 = tpu.iota {dimensions = array<i32: 1>} : vector<128x128xi32>
      %c16_i32 = arith.constant 16 : i32
      %20 = vector.broadcast %c16_i32 : i32 to vector<128x128xi32>
      %21 = arith.cmpi slt, %19, %20 : vector<128x128xi32>
      %cst_17 = arith.constant -1.000000e+30 : f32
      %22 = vector.broadcast %cst_17 : f32 to vector<128x128xf32>
      %23 = arith.select %21, %18, %22 : vector<128x128xi1>, vector<128x128xf32>
      %cst_18 = arith.constant dense<0xFF800000> : vector<128xf32>
      %24 = vector.multi_reduction <maximumf>, %23, %cst_18 [1] : vector<128x128xf32> to vector<128xf32>
      %25 = vector.shape_cast %24 : vector<128xf32> to vector<128x1xf32>
      %26 = vector.broadcast %25 : vector<128x1xf32> to vector<128x128xf32>
      %27 = arith.subf %23, %26 : vector<128x128xf32>
      %28 = math.exp %27 : vector<128x128xf32>
      %cst_19 = arith.constant dense<0.000000e+00> : vector<128xf32>
      %29 = vector.multi_reduction <add>, %28, %cst_19 [1] : vector<128x128xf32> to vector<128xf32>
      %30 = vector.shape_cast %29 : vector<128xf32> to vector<128x1xf32>
      %31 = math.log %30 : vector<128x1xf32>
      %32 = vector.broadcast %31 : vector<128x1xf32> to vector<128x128xf32>
      %33 = arith.subf %27, %32 : vector<128x128xf32>
      %c0_20 = arith.constant 0 : index
      %c0_21 = arith.constant 0 : index
      %34 = vector.load %arg6[%c0_20, %c0_21] : memref<128x128xf32, #tpu.memory_space<vmem>>, vector<128x128xf32>
      tpu.vector_store %arg6[%c0_20, %c0_21], %33 {strides = array<i32>} : memref<128x128xf32, #tpu.memory_space<vmem>>, vector<128x128xf32>,
    } else {
    }
    return
  }
  func.func @transform_0(%arg0: i32, %arg1: i32) -> (i32, i32) {
    %c0_i32 = arith.constant 0 : i32
    return %arg0, %arg1 : i32, i32
  }
  func.func @transform_1(%arg0: i32, %arg1: i32) -> (i32, i32) {
    %c0_i32 = arith.constant 0 : i32
    %c0_i32_0 = arith.constant 0 : i32
    return %arg1, %c0_i32 : i32, i32
  }
  func.func @transform_2(%arg0: i32, %arg1: i32) -> (i32, i32) {
    %c0_i32 = arith.constant 0 : i32
    %c0_i32_0 = arith.constant 0 : i32
    %c0_i32_1 = arith.constant 0 : i32
    return %c0_i32, %c0_i32_0 : i32, i32
  }
  func.func @transform_3(%arg0: i32, %arg1: i32) -> (i32, i32) {
    %c0_i32 = arith.constant 0 : i32
    %c0_i32_0 = arith.constant 0 : i32
    %c0_i32_1 = arith.constant 0 : i32
    return %c0_i32, %c0_i32_0 : i32, i32
  }
  func.func @transform_4(%arg0: i32, %arg1: i32) -> (i32, i32) {
    %c0_i32 = arith.constant 0 : i32
    %c0_i32_0 = arith.constant 0 : i32
    return %arg0, %c0_i32 : i32, i32
  }
}

module attributes {stable_mosaic.version = 11 : i64} {
  func.func @_aggregate_kernel(%arg0: i32, %arg1: i32, %arg2: memref<128x128xbf16, #tpu.memory_space<vmem>>, %arg3: memref<128x128xbf16, #tpu.memory_space<vmem>>, %arg4: memref<128x128xbf16, #tpu.memory_space<vmem>>, %arg5: memref<1x128xf32, #tpu.memory_space<vmem>>, %arg6: memref<128x128xbf16, #tpu.memory_space<vmem>>, %arg7: memref<128x128xf32, #tpu.memory_space<vmem>>) attributes {dimension_semantics = [#tpu.dimension_semantics<parallel>, #tpu.dimension_semantics<arbitrary>], iteration_bounds = array<i64: 1, 1>, scalar_prefetch = 0 : i64, scratch_operands = 1 : i64, tpu.core_type = #tpu.core_type<tc>, window_params = [{transform_indices = @transform_0, window_bounds = array<i64: 128, 128>}, {transform_indices = @transform_1, window_bounds = array<i64: 128, 128>}, {pipeline_mode = #tpu.pipeline_mode<synchronous>, transform_indices = @transform_2, window_bounds = array<i64: 128, 128>}, {pipeline_mode = #tpu.pipeline_mode<synchronous>, transform_indices = @transform_3, window_bounds = array<i64: 1, 128>}, {transform_indices = @transform_4, window_bounds = array<i64: 128, 128>}]} {
    %c0_i32 = arith.constant 0 : i32
    %0 = arith.cmpi eq, %arg1, %c0_i32 : i32
    %1 = arith.extui %0 : i1 to i32
    %c0_i32_0 = arith.constant 0 : i32
    %2 = arith.cmpi ne, %1, %c0_i32_0 : i32
    scf.if %2 {
      %cst_13 = arith.constant 0.000000e+00 : f32
      %15 = vector.broadcast %cst_13 : f32 to vector<128x128xf32>
      %c0_14 = arith.constant 0 : index
      %c0_15 = arith.constant 0 : index
      %16 = vector.load %arg7[%c0_14, %c0_15] : memref<128x128xf32, #tpu.memory_space<vmem>>, vector<128x128xf32>
      tpu.vector_store %arg7[%c0_14, %c0_15], %15 {strides = array<i32>} : memref<128x128xf32, #tpu.memory_space<vmem>>, vector<128x128xf32>,
    } else {
    }
    %c0 = arith.constant 0 : index
    %c0_1 = arith.constant 0 : index
    %3 = vector.load %arg3[%c0, %c0_1] : memref<128x128xbf16, #tpu.memory_space<vmem>>, vector<128x128xbf16>
    %c0_2 = arith.constant 0 : index
    %c0_3 = arith.constant 0 : index
    %4 = vector.load %arg4[%c0_2, %c0_3] : memref<128x128xbf16, #tpu.memory_space<vmem>>, vector<128x128xbf16>
    %cst = arith.constant dense<0.000000e+00> : vector<128x128xf32>
    %5 = tpu.matmul %3, %4, %cst {dimension_numbers = #tpu.dot_dimension_numbers<[1], [0], [0], [1], [0, 0, 1, 1], [], []>} : vector<128x128xbf16>, vector<128x128xbf16>, vector<128x128xf32> -> vector<128x128xf32>
    %6 = arith.truncf %5 : vector<128x128xf32> to vector<128x128xbf16>
    %c0_4 = arith.constant 0 : index
    %c0_5 = arith.constant 0 : index
    %7 = vector.load %arg7[%c0_4, %c0_5] : memref<128x128xf32, #tpu.memory_space<vmem>>, vector<128x128xf32>
    %c0_6 = arith.constant 0 : index
    %c0_7 = arith.constant 0 : index
    %8 = vector.load %arg2[%c0_6, %c0_7] : memref<128x128xbf16, #tpu.memory_space<vmem>>, vector<128x128xbf16>
    %cst_8 = arith.constant dense<0.000000e+00> : vector<128x128xf32>
    %9 = tpu.matmul %8, %6, %cst_8 {dimension_numbers = #tpu.dot_dimension_numbers<[1], [0], [0], [1], [0, 0, 1, 1], [], []>} : vector<128x128xbf16>, vector<128x128xbf16>, vector<128x128xf32> -> vector<128x128xf32>
    %10 = arith.addf %7, %9 : vector<128x128xf32>
    %c0_9 = arith.constant 0 : index
    %c0_10 = arith.constant 0 : index
    %11 = vector.load %arg7[%c0_9, %c0_10] : memref<128x128xf32, #tpu.memory_space<vmem>>, vector<128x128xf32>
    tpu.vector_store %arg7[%c0_9, %c0_10], %10 {strides = array<i32>} : memref<128x128xf32, #tpu.memory_space<vmem>>, vector<128x128xf32>,
    %c0_i32_11 = arith.constant 0 : i32
    %12 = arith.cmpi eq, %arg1, %c0_i32_11 : i32
    %13 = arith.extui %12 : i1 to i32
    %c0_i32_12 = arith.constant 0 : i32
    %14 = arith.cmpi ne, %13, %c0_i32_12 : i32
    scf.if %14 {
      %c0_13 = arith.constant 0 : index
      %c0_14 = arith.constant 0 : index
      %15 = vector.load %arg7[%c0_13, %c0_14] : memref<128x128xf32, #tpu.memory_space<vmem>>, vector<128x128xf32>
      %c0_15 = arith.constant 0 : index
      %c0_16 = arith.constant 0 : index
      %16 = vector.load %arg5[%c0_15, %c0_16] : memref<1x128xf32, #tpu.memory_space<vmem>>, vector<1x128xf32>
      %17 = vector.broadcast %16 : vector<1x128xf32> to vector<128x128xf32>
      %18 = arith.addf %15, %17 : vector<128x128xf32>
      %cst_17 = arith.constant 0.000000e+00 : f32
      %19 = vector.broadcast %cst_17 : f32 to vector<128x128xf32>
      %20 = arith.maximumf %18, %19 : vector<128x128xf32>
      %21 = arith.truncf %20 : vector<128x128xf32> to vector<128x128xbf16>
      %c0_18 = arith.constant 0 : index
      %c0_19 = arith.constant 0 : index
      %22 = vector.load %arg6[%c0_18, %c0_19] : memref<128x128xbf16, #tpu.memory_space<vmem>>, vector<128x128xbf16>
      tpu.vector_store %arg6[%c0_18, %c0_19], %21 {strides = array<i32>} : memref<128x128xbf16, #tpu.memory_space<vmem>>, vector<128x128xbf16>,
    } else {
    }
    return
  }
  func.func @transform_0(%arg0: i32, %arg1: i32) -> (i32, i32) {
    %c0_i32 = arith.constant 0 : i32
    return %arg0, %arg1 : i32, i32
  }
  func.func @transform_1(%arg0: i32, %arg1: i32) -> (i32, i32) {
    %c0_i32 = arith.constant 0 : i32
    %c0_i32_0 = arith.constant 0 : i32
    return %arg1, %c0_i32 : i32, i32
  }
  func.func @transform_2(%arg0: i32, %arg1: i32) -> (i32, i32) {
    %c0_i32 = arith.constant 0 : i32
    %c0_i32_0 = arith.constant 0 : i32
    %c0_i32_1 = arith.constant 0 : i32
    return %c0_i32, %c0_i32_0 : i32, i32
  }
  func.func @transform_3(%arg0: i32, %arg1: i32) -> (i32, i32) {
    %c0_i32 = arith.constant 0 : i32
    %c0_i32_0 = arith.constant 0 : i32
    %c0_i32_1 = arith.constant 0 : i32
    return %c0_i32, %c0_i32_0 : i32, i32
  }
  func.func @transform_4(%arg0: i32, %arg1: i32) -> (i32, i32) {
    %c0_i32 = arith.constant 0 : i32
    %c0_i32_0 = arith.constant 0 : i32
    return %arg0, %c0_i32 : i32, i32
  }
}

</mosaic_0001>

<llo_original>
// kernel: gcn_forward.3
$region0: #{gcn_forward.3}
  #allocation0 [shape = 'u32[]', space=smem, size = 0x4, offset = 0x4, fixed_abs, tag = 'smem constant byte address 0x4 - core index']
  #allocation1 [shape = 'u32[72,128]{1,0:T(1,128)}', space=vmem, size = 0x9000, scoped, tag = 'internal scratch']
  #allocation2 [shape = 'f32[128,128]{1,0:T(8,128)}', space=vmem, size = 0x10000, scoped, tag = 'scratch operand']
  %s0 = inlined_call_operand.vmem [shape: bf16[128,128], index: 0, kind: input, shape index: {}]
  %s1 = inlined_call_operand.vmem [shape: bf16[128,128], index: 1, kind: input, shape index: {}]
  %s2 = inlined_call_operand.vmem [shape: bf16[128,128], index: 2, kind: input, shape index: {}]
  %s3 = inlined_call_operand.vmem [shape: f32[1,128], index: 3, kind: input, shape index: {}]
  %s4 = inlined_call_operand.vmem [shape: f32[128,128], index: 4, kind: output, shape index: {}]
  %s5 = sld [smem:[#allocation0]]
  $region34: #{gcn_forward.3} parent=0
    _
  %s7 = ssub.s32 1, %s5
  %s8 = scalar_select 0, %s7, %s5
  // Predicated region
  $region2: #{gcn_forward.3} parent=0 // pred_check
    _
  $region3: #{gcn_forward.3} parent=0 // pred_check_branch
    %10 = sbr.rel (0) target = $region5
  $region4: #{gcn_forward.3} parent=0 // pred_region
    _
  $region5: #{gcn_forward.3} parent=0 // pred_fallthru
    _
  // Predicated region
  $region6: #{gcn_forward.3} parent=0 // pred_check
    _
  $region7: #{gcn_forward.3} parent=0 // pred_check_branch
    %12 = sbr.rel (0) target = $region9
  $region8: #{gcn_forward.3} parent=0 // pred_region
    _
  $region9: #{gcn_forward.3} parent=0 // pred_fallthru
    _
  // Predicated region
  $region10: #{gcn_forward.3} parent=0 // pred_check
    _
  $region11: #{gcn_forward.3} parent=0 // pred_check_branch
    %14 = sbr.rel (0) target = $region13
  $region12: #{gcn_forward.3} parent=0 // pred_region
    _
  $region13: #{gcn_forward.3} parent=0 // pred_fallthru
    _
  // Predicated region
  $region14: #{gcn_forward.3} parent=0 // pred_check
    _
  $region15: #{gcn_forward.3} parent=0 // pred_check_branch
    %16 = sbr.rel (0) target = $region17
  $region16: #{gcn_forward.3} parent=0 // pred_region
    _
  $region17: #{gcn_forward.3} parent=0 // pred_fallthru
    _
  %p17 = scmp.eq.s32.totalorder 0, 0
  // Predicated region
  $region18: #{gcn_forward.3} parent=0 // pred_check
    %p18 = pneg %p17
  $region19: #{gcn_forward.3} parent=0 // pred_check_branch
    %20 = sbr.rel (%p18) target = $region21
  $region20: #{gcn_forward.3} parent=0 // pred_region
    %21 = vst [vmem:[#allocation2] sm:$0xff] 0.0
    %22 = vst [vmem:[#allocation2 + $0x8] sm:$0xff] 0.0
    %23 = vst [vmem:[#allocation2 + $0x10] sm:$0xff] 0.0
    %24 = vst [vmem:[#allocation2 + $0x18] sm:$0xff] 0.0
    %25 = vst [vmem:[#allocation2 + $0x20] sm:$0xff] 0.0
    %26 = vst [vmem:[#allocation2 + $0x28] sm:$0xff] 0.0
    %27 = vst [vmem:[#allocation2 + $0x30] sm:$0xff] 0.0
    %28 = vst [vmem:[#allocation2 + $0x38] sm:$0xff] 0.0
    %29 = vst [vmem:[#allocation2 + $0x40] sm:$0xff] 0.0
    %30 = vst [vmem:[#allocation2 + $0x48] sm:$0xff] 0.0
    %31 = vst [vmem:[#allocation2 + $0x50] sm:$0xff] 0.0
    %32 = vst [vmem:[#allocation2 + $0x58] sm:$0xff] 0.0
    %33 = vst [vmem:[#allocation2 + $0x60] sm:$0xff] 0.0
    %34 = vst [vmem:[#allocation2 + $0x68] sm:$0xff] 0.0
    %35 = vst [vmem:[#allocation2 + $0x70] sm:$0xff] 0.0
    %36 = vst [vmem:[#allocation2 + $0x78] sm:$0xff] 0.0
  $region21: #{gcn_forward.3} parent=0 // pred_fallthru
    _
  %v37 = vld [vmem:[%s1] sm:$0xf]
  %v38 = vld [vmem:[%s1 + $0x4] sm:$0xf]
  %v39 = vld [vmem:[%s1 + $0x8] sm:$0xf]
  %v40 = vld [vmem:[%s1 + $0xc] sm:$0xf]
  %v41 = vld [vmem:[%s1 + $0x10] sm:$0xf]
  %v42 = vld [vmem:[%s1 + $0x14] sm:$0xf]
  %v43 = vld [vmem:[%s1 + $0x18] sm:$0xf]
  %v44 = vld [vmem:[%s1 + $0x1c] sm:$0xf]
  %v45 = vld [vmem:[%s1 + $0x20] sm:$0xf]
  %v46 = vld [vmem:[%s1 + $0x24] sm:$0xf]
  %v47 = vld [vmem:[%s1 + $0x28] sm:$0xf]
  %v48 = vld [vmem:[%s1 + $0x2c] sm:$0xf]
  %v49 = vld [vmem:[%s1 + $0x30] sm:$0xf]
  %v50 = vld [vmem:[%s1 + $0x34] sm:$0xf]
  %v51 = vld [vmem:[%s1 + $0x38] sm:$0xf]
  %v52 = vld [vmem:[%s1 + $0x3c] sm:$0xf]
  %v53 = vld [vmem:[%s2] sm:$0xf]
  %v54 = vld [vmem:[%s2 + $0x4] sm:$0xf]
  %v55 = vld [vmem:[%s2 + $0x8] sm:$0xf]
  %v56 = vld [vmem:[%s2 + $0xc] sm:$0xf]
  %v57 = vld [vmem:[%s2 + $0x10] sm:$0xf]
  %v58 = vld [vmem:[%s2 + $0x14] sm:$0xf]
  %v59 = vld [vmem:[%s2 + $0x18] sm:$0xf]
  %v60 = vld [vmem:[%s2 + $0x1c] sm:$0xf]
  %v61 = vld [vmem:[%s2 + $0x20] sm:$0xf]
  %v62 = vld [vmem:[%s2 + $0x24] sm:$0xf]
  %v63 = vld [vmem:[%s2 + $0x28] sm:$0xf]
  %v64 = vld [vmem:[%s2 + $0x2c] sm:$0xf]
  %v65 = vld [vmem:[%s2 + $0x30] sm:$0xf]
  %v66 = vld [vmem:[%s2 + $0x34] sm:$0xf]
  %v67 = vld [vmem:[%s2 + $0x38] sm:$0xf]
  %v68 = vld [vmem:[%s2 + $0x3c] sm:$0xf]
  %v85 = vunpack.c.l.b16 %v37
  %v86 = vunpack.c.l.b16 %v38
  %v87 = vunpack.c.l.b16 %v39
  %v88 = vunpack.c.l.b16 %v40
  %v89 = vunpack.c.l.b16 %v41
  %v90 = vunpack.c.l.b16 %v42
  %v91 = vunpack.c.l.b16 %v43
  %v92 = vunpack.c.l.b16 %v44
  %v93 = vunpack.c.l.b16 %v45
  %v94 = vunpack.c.l.b16 %v46
  %v95 = vunpack.c.l.b16 %v47
  %v96 = vunpack.c.l.b16 %v48
  %v97 = vunpack.c.l.b16 %v49
  %v98 = vunpack.c.l.b16 %v50
  %v99 = vunpack.c.l.b16 %v51
  %v100 = vunpack.c.l.b16 %v52
  %v101 = vpack.c.b16 %v86, %v85
  %v102 = vpack.c.b16 %v88, %v87
  %v103 = vpack.c.b16 %v90, %v89
  %v104 = vpack.c.b16 %v92, %v91
  %v105 = vpack.c.b16 %v94, %v93
  %v106 = vpack.c.b16 %v96, %v95
  %v107 = vpack.c.b16 %v98, %v97
  %v108 = vpack.c.b16 %v100, %v99
  %v133 = vunpack.c.l.b16 %v53
  %v134 = vunpack.c.l.b16 %v54
  %v135 = vunpack.c.l.b16 %v55
  %v136 = vunpack.c.l.b16 %v56
  %v137 = vunpack.c.l.b16 %v57
  %v138 = vunpack.c.l.b16 %v58
  %v139 = vunpack.c.l.b16 %v59
  %v140 = vunpack.c.l.b16 %v60
  %v141 = vunpack.c.l.b16 %v61
  %v142 = vunpack.c.l.b16 %v62
  %v143 = vunpack.c.l.b16 %v63
  %v144 = vunpack.c.l.b16 %v64
  %v145 = vunpack.c.l.b16 %v65
  %v146 = vunpack.c.l.b16 %v66
  %v147 = vunpack.c.l.b16 %v67
  %v148 = vunpack.c.l.b16 %v68
  %v149 = vpack.c.b16 %v134, %v133
  %v150 = vpack.c.b16 %v136, %v135
  %v151 = vpack.c.b16 %v138, %v137
  %v152 = vpack.c.b16 %v140, %v139
  %v153 = vpack.c.b16 %v142, %v141
  %v154 = vpack.c.b16 %v144, %v143
  %v155 = vpack.c.b16 %v146, %v145
  %v156 = vpack.c.b16 %v148, %v147
  %165 = vmatpush.bf16.msra.mxu0 %v156
  %166 = vmatpush.bf16.msra.mxu0 %v155
  %167 = vmatpush.bf16.msra.mxu0 %v154
  %168 = vmatpush.bf16.msra.mxu0 %v153
  %169 = vmatpush.bf16.msra.mxu0 %v152
  %170 = vmatpush.bf16.msra.mxu0 %v151
  %171 = vmatpush.bf16.msra.mxu0 %v150
  %172 = vmatpush.bf16.msra.mxu0 %v149
  %173 = vmatmul.bf16.gmra.mxu0 %v101
  %v174 = vpop.f32.mrf.mxu0
  %v175 = vadd.f32 0.0, %v174
  %v176 = vpop.f32.mrf.mxu0
  %v177 = vadd.f32 0.0, %v176
  %178 = vmatmul.bf16.gmra.mxu0 %v102
  %v179 = vpop.f32.mrf.mxu0
  %v180 = vadd.f32 0.0, %v179
  %v181 = vpop.f32.mrf.mxu0
  %v182 = vadd.f32 0.0, %v181
  %183 = vmatmul.bf16.gmra.mxu0 %v103
  %v184 = vpop.f32.mrf.mxu0
  %v185 = vadd.f32 0.0, %v184
  %v186 = vpop.f32.mrf.mxu0
  %v187 = vadd.f32 0.0, %v186
  %188 = vmatmul.bf16.gmra.mxu0 %v104
  %v189 = vpop.f32.mrf.mxu0
  %v190 = vadd.f32 0.0, %v189
  %v191 = vpop.f32.mrf.mxu0
  %v192 = vadd.f32 0.0, %v191
  %193 = vmatmul.bf16.gmra.mxu0 %v105
  %v194 = vpop.f32.mrf.mxu0
  %v195 = vadd.f32 0.0, %v194
  %v196 = vpop.f32.mrf.mxu0
  %v197 = vadd.f32 0.0, %v196
  %198 = vmatmul.bf16.gmra.mxu0 %v106
  %v199 = vpop.f32.mrf.mxu0
  %v200 = vadd.f32 0.0, %v199
  %v201 = vpop.f32.mrf.mxu0
  %v202 = vadd.f32 0.0, %v201
  %203 = vmatmul.bf16.gmra.mxu0 %v107
  %v204 = vpop.f32.mrf.mxu0
  %v205 = vadd.f32 0.0, %v204
  %v206 = vpop.f32.mrf.mxu0
  %v207 = vadd.f32 0.0, %v206
  %208 = vmatmul.bf16.gmra.mxu0 %v108
  %v209 = vpop.f32.mrf.mxu0
  %v210 = vadd.f32 0.0, %v209
  %v211 = vpop.f32.mrf.mxu0
  %v212 = vadd.f32 0.0, %v211
  %213 = vdwg.mxu0
  %v214 = vpack.c.bf16 %v177, %v175
  %v215 = vpack.c.bf16 %v182, %v180
  %v216 = vpack.c.bf16 %v187, %v185
  %v217 = vpack.c.bf16 %v192, %v190
  %v218 = vpack.c.bf16 %v197, %v195
  %v219 = vpack.c.bf16 %v202, %v200
  %v220 = vpack.c.bf16 %v207, %v205
  %v221 = vpack.c.bf16 %v212, %v210
  %v222 = vld [vmem:[#allocation2] sm:$0xff]
  %v223 = vld [vmem:[#allocation2 + $0x8] sm:$0xff]
  %v224 = vld [vmem:[#allocation2 + $0x10] sm:$0xff]
  %v225 = vld [vmem:[#allocation2 + $0x18] sm:$0xff]
  %v226 = vld [vmem:[#allocation2 + $0x20] sm:$0xff]
  %v227 = vld [vmem:[#allocation2 + $0x28] sm:$0xff]
  %v228 = vld [vmem:[#allocation2 + $0x30] sm:$0xff]
  %v229 = vld [vmem:[#allocation2 + $0x38] sm:$0xff]
  %v230 = vld [vmem:[#allocation2 + $0x40] sm:$0xff]
  %v231 = vld [vmem:[#allocation2 + $0x48] sm:$0xff]
  %v232 = vld [vmem:[#allocation2 + $0x50] sm:$0xff]
  %v233 = vld [vmem:[#allocation2 + $0x58] sm:$0xff]
  %v234 = vld [vmem:[#allocation2 + $0x60] sm:$0xff]
  %v235 = vld [vmem:[#allocation2 + $0x68] sm:$0xff]
  %v236 = vld [vmem:[#allocation2 + $0x70] sm:$0xff]
  %v237 = vld [vmem:[#allocation2 + $0x78] sm:$0xff]
  %v238 = vld [vmem:[%s0] sm:$0xf]
  %v239 = vld [vmem:[%s0 + $0x4] sm:$0xf]
  %v240 = vld [vmem:[%s0 + $0x8] sm:$0xf]
  %v241 = vld [vmem:[%s0 + $0xc] sm:$0xf]
  %v242 = vld [vmem:[%s0 + $0x10] sm:$0xf]
  %v243 = vld [vmem:[%s0 + $0x14] sm:$0xf]
  %v244 = vld [vmem:[%s0 + $0x18] sm:$0xf]
  %v245 = vld [vmem:[%s0 + $0x1c] sm:$0xf]
  %v246 = vld [vmem:[%s0 + $0x20] sm:$0xf]
  %v247 = vld [vmem:[%s0 + $0x24] sm:$0xf]
  %v248 = vld [vmem:[%s0 + $0x28] sm:$0xf]
  %v249 = vld [vmem:[%s0 + $0x2c] sm:$0xf]
  %v250 = vld [vmem:[%s0 + $0x30] sm:$0xf]
  %v251 = vld [vmem:[%s0 + $0x34] sm:$0xf]
  %v252 = vld [vmem:[%s0 + $0x38] sm:$0xf]
  %v253 = vld [vmem:[%s0 + $0x3c] sm:$0xf]
  %v270 = vunpack.c.l.b16 %v238
  %v271 = vunpack.c.l.b16 %v239
  %v272 = vunpack.c.l.b16 %v240
  %v273 = vunpack.c.l.b16 %v241
  %v274 = vunpack.c.l.b16 %v242
  %v275 = vunpack.c.l.b16 %v243
  %v276 = vunpack.c.l.b16 %v244
  %v277 = vunpack.c.l.b16 %v245
  %v278 = vunpack.c.l.b16 %v246
  %v279 = vunpack.c.l.b16 %v247
  %v280 = vunpack.c.l.b16 %v248
  %v281 = vunpack.c.l.b16 %v249
  %v282 = vunpack.c.l.b16 %v250
  %v283 = vunpack.c.l.b16 %v251
  %v284 = vunpack.c.l.b16 %v252
  %v285 = vunpack.c.l.b16 %v253
  %v286 = vpack.c.b16 %v271, %v270
  %v287 = vpack.c.b16 %v273, %v272
  %v288 = vpack.c.b16 %v275, %v274
  %v289 = vpack.c.b16 %v277, %v276
  %v290 = vpack.c.b16 %v279, %v278
  %v291 = vpack.c.b16 %v281, %v280
  %v292 = vpack.c.b16 %v283, %v282
  %v293 = vpack.c.b16 %v285, %v284
  %302 = vmatpush.bf16.msra.mxu0 %v221
  %303 = vmatpush.bf16.msra.mxu0 %v220
  %304 = vmatpush.bf16.msra.mxu0 %v219
  %305 = vmatpush.bf16.msra.mxu0 %v218
  %306 = vmatpush.bf16.msra.mxu0 %v217
  %307 = vmatpush.bf16.msra.mxu0 %v216
  %308 = vmatpush.bf16.msra.mxu0 %v215
  %309 = vmatpush.bf16.msra.mxu0 %v214
  %310 = vmatmul.bf16.gmra.mxu0 %v286
  %v311 = vpop.f32.mrf.mxu0
  %v312 = vadd.f32 0.0, %v311
  %v313 = vpop.f32.mrf.mxu0
  %v314 = vadd.f32 0.0, %v313
  %315 = vmatmul.bf16.gmra.mxu0 %v287
  %v316 = vpop.f32.mrf.mxu0
  %v317 = vadd.f32 0.0, %v316
  %v318 = vpop.f32.mrf.mxu0
  %v319 = vadd.f32 0.0, %v318
  %320 = vmatmul.bf16.gmra.mxu0 %v288
  %v321 = vpop.f32.mrf.mxu0
  %v322 = vadd.f32 0.0, %v321
  %v323 = vpop.f32.mrf.mxu0
  %v324 = vadd.f32 0.0, %v323
  %325 = vmatmul.bf16.gmra.mxu0 %v289
  %v326 = vpop.f32.mrf.mxu0
  %v327 = vadd.f32 0.0, %v326
  %v328 = vpop.f32.mrf.mxu0
  %v329 = vadd.f32 0.0, %v328
  %330 = vmatmul.bf16.gmra.mxu0 %v290
  %v331 = vpop.f32.mrf.mxu0
  %v332 = vadd.f32 0.0, %v331
  %v333 = vpop.f32.mrf.mxu0
  %v334 = vadd.f32 0.0, %v333
  %335 = vmatmul.bf16.gmra.mxu0 %v291
  %v336 = vpop.f32.mrf.mxu0
  %v337 = vadd.f32 0.0, %v336
  %v338 = vpop.f32.mrf.mxu0
  %v339 = vadd.f32 0.0, %v338
  %340 = vmatmul.bf16.gmra.mxu0 %v292
  %v341 = vpop.f32.mrf.mxu0
  %v342 = vadd.f32 0.0, %v341
  %v343 = vpop.f32.mrf.mxu0
  %v344 = vadd.f32 0.0, %v343
  %345 = vmatmul.bf16.gmra.mxu0 %v293
  %v346 = vpop.f32.mrf.mxu0
  %v347 = vadd.f32 0.0, %v346
  %v348 = vpop.f32.mrf.mxu0
  %v349 = vadd.f32 0.0, %v348
  %350 = vdwg.mxu0
  %v351 = vadd.f32 %v222, %v312
  %v352 = vadd.f32 %v223, %v314
  %v353 = vadd.f32 %v224, %v317
  %v354 = vadd.f32 %v225, %v319
  %v355 = vadd.f32 %v226, %v322
  %v356 = vadd.f32 %v227, %v324
  %v357 = vadd.f32 %v228, %v327
  %v358 = vadd.f32 %v229, %v329
  %v359 = vadd.f32 %v230, %v332
  %v360 = vadd.f32 %v231, %v334
  %v361 = vadd.f32 %v232, %v337
  %v362 = vadd.f32 %v233, %v339
  %v363 = vadd.f32 %v234, %v342
  %v364 = vadd.f32 %v235, %v344
  %v365 = vadd.f32 %v236, %v347
  %v366 = vadd.f32 %v237, %v349
  %367 = vst [vmem:[#allocation2] sm:$0xff] %v351
  %368 = vst [vmem:[#allocation2 + $0x8] sm:$0xff] %v352
  %369 = vst [vmem:[#allocation2 + $0x10] sm:$0xff] %v353
  %370 = vst [vmem:[#allocation2 + $0x18] sm:$0xff] %v354
  %371 = vst [vmem:[#allocation2 + $0x20] sm:$0xff] %v355
  %372 = vst [vmem:[#allocation2 + $0x28] sm:$0xff] %v356
  %373 = vst [vmem:[#allocation2 + $0x30] sm:$0xff] %v357
  %374 = vst [vmem:[#allocation2 + $0x38] sm:$0xff] %v358
  %375 = vst [vmem:[#allocation2 + $0x40] sm:$0xff] %v359
  %376 = vst [vmem:[#allocation2 + $0x48] sm:$0xff] %v360
  %377 = vst [vmem:[#allocation2 + $0x50] sm:$0xff] %v361
  %378 = vst [vmem:[#allocation2 + $0x58] sm:$0xff] %v362
  %379 = vst [vmem:[#allocation2 + $0x60] sm:$0xff] %v363
  %380 = vst [vmem:[#allocation2 + $0x68] sm:$0xff] %v364
  %381 = vst [vmem:[#allocation2 + $0x70] sm:$0xff] %v365
  %382 = vst [vmem:[#allocation2 + $0x78] sm:$0xff] %v366
  // Predicated region
  $region22: #{gcn_forward.3} parent=0 // pred_check
    %p383 = pneg %p17
  $region23: #{gcn_forward.3} parent=0 // pred_check_branch
    %385 = sbr.rel (%p383) target = $region25
  $region24: #{gcn_forward.3} parent=0 // pred_region
    %v386 = vld [vmem:[#allocation2] sm:$0xff]
    %v387 = vld [vmem:[#allocation2 + $0x8] sm:$0xff]
    %v388 = vld [vmem:[#allocation2 + $0x10] sm:$0xff]
    %v389 = vld [vmem:[#allocation2 + $0x18] sm:$0xff]
    %v390 = vld [vmem:[#allocation2 + $0x20] sm:$0xff]
    %v391 = vld [vmem:[#allocation2 + $0x28] sm:$0xff]
    %v392 = vld [vmem:[#allocation2 + $0x30] sm:$0xff]
    %v393 = vld [vmem:[#allocation2 + $0x38] sm:$0xff]
    %v394 = vld [vmem:[#allocation2 + $0x40] sm:$0xff]
    %v395 = vld [vmem:[#allocation2 + $0x48] sm:$0xff]
    %v396 = vld [vmem:[#allocation2 + $0x50] sm:$0xff]
    %v397 = vld [vmem:[#allocation2 + $0x58] sm:$0xff]
    %v398 = vld [vmem:[#allocation2 + $0x60] sm:$0xff]
    %v399 = vld [vmem:[#allocation2 + $0x68] sm:$0xff]
    %v400 = vld [vmem:[#allocation2 + $0x70] sm:$0xff]
    %v401 = vld [vmem:[#allocation2 + $0x78] sm:$0xff]
    %v402 = vld [vmem:[%s3] sm:$0x1]
    %v404 = vperm.slane %v402, 0
    %v406 = vadd.f32 %v386, %v404
    %v407 = vadd.f32 %v387, %v404
    %v408 = vadd.f32 %v388, %v404
    %v409 = vadd.f32 %v389, %v404
    %v410 = vadd.f32 %v390, %v404
    %v411 = vadd.f32 %v391, %v404
    %v412 = vadd.f32 %v392, %v404
    %v413 = vadd.f32 %v393, %v404
    %v414 = vadd.f32 %v394, %v404
    %v415 = vadd.f32 %v395, %v404
    %v416 = vadd.f32 %v396, %v404
    %v417 = vadd.f32 %v397, %v404
    %v418 = vadd.f32 %v398, %v404
    %v419 = vadd.f32 %v399, %v404
    %v420 = vadd.f32 %v400, %v404
    %v421 = vadd.f32 %v401, %v404
    %v422 = vlaneseq
    %v423 = vand.u32 %v422, 127
    %vm424 = vcmp.lt.s32.totalorder %v423, 16
    %v425 = vsel %vm424, %v406, -1e+30
    %v426 = vsel %vm424, %v407, -1e+30
    %v427 = vsel %vm424, %v408, -1e+30
    %v428 = vsel %vm424, %v409, -1e+30
    %v429 = vsel %vm424, %v410, -1e+30
    %v430 = vsel %vm424, %v411, -1e+30
    %v431 = vsel %vm424, %v412, -1e+30
    %v432 = vsel %vm424, %v413, -1e+30
    %v433 = vsel %vm424, %v414, -1e+30
    %v434 = vsel %vm424, %v415, -1e+30
    %v435 = vsel %vm424, %v416, -1e+30
    %v436 = vsel %vm424, %v417, -1e+30
    %v437 = vsel %vm424, %v418, -1e+30
    %v438 = vsel %vm424, %v419, -1e+30
    %v439 = vsel %vm424, %v420, -1e+30
    %v440 = vsel %vm424, %v421, -1e+30
    %441 = vmax.xlane.f32.xlu0 %v425
    %v442 = vpop.xlane.xlu0 %441
    %443 = vmax.xlane.f32.xlu0 %v426
    %v444 = vpop.xlane.xlu0 %443
    %445 = vmax.xlane.f32.xlu0 %v427
    %v446 = vpop.xlane.xlu0 %445
    %447 = vmax.xlane.f32.xlu0 %v428
    %v448 = vpop.xlane.xlu0 %447
    %449 = vmax.xlane.f32.xlu0 %v429
    %v450 = vpop.xlane.xlu0 %449
    %451 = vmax.xlane.f32.xlu0 %v430
    %v452 = vpop.xlane.xlu0 %451
    %453 = vmax.xlane.f32.xlu0 %v431
    %v454 = vpop.xlane.xlu0 %453
    %455 = vmax.xlane.f32.xlu0 %v432
    %v456 = vpop.xlane.xlu0 %455
    %457 = vmax.xlane.f32.xlu0 %v433
    %v458 = vpop.xlane.xlu0 %457
    %459 = vmax.xlane.f32.xlu0 %v434
    %v460 = vpop.xlane.xlu0 %459
    %461 = vmax.xlane.f32.xlu0 %v435
    %v462 = vpop.xlane.xlu0 %461
    %463 = vmax.xlane.f32.xlu0 %v436
    %v464 = vpop.xlane.xlu0 %463
    %465 = vmax.xlane.f32.xlu0 %v437
    %v466 = vpop.xlane.xlu0 %465
    %467 = vmax.xlane.f32.xlu0 %v438
    %v468 = vpop.xlane.xlu0 %467
    %469 = vmax.xlane.f32.xlu0 %v439
    %v470 = vpop.xlane.xlu0 %469
    %471 = vmax.xlane.f32.xlu0 %v440
    %v472 = vpop.xlane.xlu0 %471
    %v473 = vsub.f32 %v425, %v442
    %v474 = vsub.f32 %v426, %v444
    %v475 = vsub.f32 %v427, %v446
    %v476 = vsub.f32 %v428, %v448
    %v477 = vsub.f32 %v429, %v450
    %v478 = vsub.f32 %v430, %v452
    %v479 = vsub.f32 %v431, %v454
    %v480 = vsub.f32 %v432, %v456
    %v481 = vsub.f32 %v433, %v458
    %v482 = vsub.f32 %v434, %v460
    %v483 = vsub.f32 %v435, %v462
    %v484 = vsub.f32 %v436, %v464
    %v485 = vsub.f32 %v437, %v466
    %v486 = vsub.f32 %v438, %v468
    %v487 = vsub.f32 %v439, %v470
    %v488 = vsub.f32 %v440, %v472
    %v489 = vmul.f32 %v473, 1.442695
    %v490 = vpow.pop %v489
    %v491 = vmul.f32 %v474, 1.442695
    %v492 = vpow.pop %v491
    %v493 = vmul.f32 %v475, 1.442695
    %v494 = vpow.pop %v493
    %v495 = vmul.f32 %v476, 1.442695
    %v496 = vpow.pop %v495
    %v497 = vmul.f32 %v477, 1.442695
    %v498 = vpow.pop %v497
    %v499 = vmul.f32 %v478, 1.442695
    %v500 = vpow.pop %v499
    %v501 = vmul.f32 %v479, 1.442695
    %v502 = vpow.pop %v501
    %v503 = vmul.f32 %v480, 1.442695
    %v504 = vpow.pop %v503
    %v505 = vmul.f32 %v481, 1.442695
    %v506 = vpow.pop %v505
    %v507 = vmul.f32 %v482, 1.442695
    %v508 = vpow.pop %v507
    %v509 = vmul.f32 %v483, 1.442695
    %v510 = vpow.pop %v509
    %v511 = vmul.f32 %v484, 1.442695
    %v512 = vpow.pop %v511
    %v513 = vmul.f32 %v485, 1.442695
    %v514 = vpow.pop %v513
    %v515 = vmul.f32 %v486, 1.442695
    %v516 = vpow.pop %v515
    %v517 = vmul.f32 %v487, 1.442695
    %v518 = vpow.pop %v517
    %v519 = vmul.f32 %v488, 1.442695
    %v520 = vpow.pop %v519
    %521 = vadd.xlane.f32.xlu0 %v490
    %v522 = vpop.xlane.xlu0 %521
    %523 = vadd.xlane.f32.xlu0 %v492
    %v524 = vpop.xlane.xlu0 %523
    %525 = vadd.xlane.f32.xlu0 %v494
    %v526 = vpop.xlane.xlu0 %525
    %527 = vadd.xlane.f32.xlu0 %v496
    %v528 = vpop.xlane.xlu0 %527
    %529 = vadd.xlane.f32.xlu0 %v498
    %v530 = vpop.xlane.xlu0 %529
    %531 = vadd.xlane.f32.xlu0 %v500
    %v532 = vpop.xlane.xlu0 %531
    %533 = vadd.xlane.f32.xlu0 %v502
    %v534 = vpop.xlane.xlu0 %533
    %535 = vadd.xlane.f32.xlu0 %v504
    %v536 = vpop.xlane.xlu0 %535
    %537 = vadd.xlane.f32.xlu0 %v506
    %v538 = vpop.xlane.xlu0 %537
    %539 = vadd.xlane.f32.xlu0 %v508
    %v540 = vpop.xlane.xlu0 %539
    %541 = vadd.xlane.f32.xlu0 %v510
    %v542 = vpop.xlane.xlu0 %541
    %543 = vadd.xlane.f32.xlu0 %v512
    %v544 = vpop.xlane.xlu0 %543
    %545 = vadd.xlane.f32.xlu0 %v514
    %v546 = vpop.xlane.xlu0 %545
    %547 = vadd.xlane.f32.xlu0 %v516
    %v548 = vpop.xlane.xlu0 %547
    %549 = vadd.xlane.f32.xlu0 %v518
    %v550 = vpop.xlane.xlu0 %549
    %551 = vadd.xlane.f32.xlu0 %v520
    %v552 = vpop.xlane.xlu0 %551
    %v553 = vlog2.pop %v522
    %v554 = vmul.f32 %v553, 0.6931472
    %v555 = vlog2.pop %v524
    %v556 = vmul.f32 %v555, 0.6931472
    %v557 = vlog2.pop %v526
    %v558 = vmul.f32 %v557, 0.6931472
    %v559 = vlog2.pop %v528
    %v560 = vmul.f32 %v559, 0.6931472
    %v561 = vlog2.pop %v530
    %v562 = vmul.f32 %v561, 0.6931472
    %v563 = vlog2.pop %v532
    %v564 = vmul.f32 %v563, 0.6931472
    %v565 = vlog2.pop %v534
    %v566 = vmul.f32 %v565, 0.6931472
    %v567 = vlog2.pop %v536
    %v568 = vmul.f32 %v567, 0.6931472
    %v569 = vlog2.pop %v538
    %v570 = vmul.f32 %v569, 0.6931472
    %v571 = vlog2.pop %v540
    %v572 = vmul.f32 %v571, 0.6931472
    %v573 = vlog2.pop %v542
    %v574 = vmul.f32 %v573, 0.6931472
    %v575 = vlog2.pop %v544
    %v576 = vmul.f32 %v575, 0.6931472
    %v577 = vlog2.pop %v546
    %v578 = vmul.f32 %v577, 0.6931472
    %v579 = vlog2.pop %v548
    %v580 = vmul.f32 %v579, 0.6931472
    %v581 = vlog2.pop %v550
    %v582 = vmul.f32 %v581, 0.6931472
    %v583 = vlog2.pop %v552
    %v584 = vmul.f32 %v583, 0.6931472
    %v585 = vsub.f32 %v473, %v554
    %v586 = vsub.f32 %v474, %v556
    %v587 = vsub.f32 %v475, %v558
    %v588 = vsub.f32 %v476, %v560
    %v589 = vsub.f32 %v477, %v562
    %v590 = vsub.f32 %v478, %v564
    %v591 = vsub.f32 %v479, %v566
    %v592 = vsub.f32 %v480, %v568
    %v593 = vsub.f32 %v481, %v570
    %v594 = vsub.f32 %v482, %v572
    %v595 = vsub.f32 %v483, %v574
    %v596 = vsub.f32 %v484, %v576
    %v597 = vsub.f32 %v485, %v578
    %v598 = vsub.f32 %v486, %v580
    %v599 = vsub.f32 %v487, %v582
    %v600 = vsub.f32 %v488, %v584
    %601 = vst [vmem:[%s4] sm:$0xff] %v585
    %602 = vst [vmem:[%s4 + $0x8] sm:$0xff] %v586
    %603 = vst [vmem:[%s4 + $0x10] sm:$0xff] %v587
    %604 = vst [vmem:[%s4 + $0x18] sm:$0xff] %v588
    %605 = vst [vmem:[%s4 + $0x20] sm:$0xff] %v589
    %606 = vst [vmem:[%s4 + $0x28] sm:$0xff] %v590
    %607 = vst [vmem:[%s4 + $0x30] sm:$0xff] %v591
    %608 = vst [vmem:[%s4 + $0x38] sm:$0xff] %v592
    %609 = vst [vmem:[%s4 + $0x40] sm:$0xff] %v593
    %610 = vst [vmem:[%s4 + $0x48] sm:$0xff] %v594
    %611 = vst [vmem:[%s4 + $0x50] sm:$0xff] %v595
    %612 = vst [vmem:[%s4 + $0x58] sm:$0xff] %v596
    %613 = vst [vmem:[%s4 + $0x60] sm:$0xff] %v597
    %614 = vst [vmem:[%s4 + $0x68] sm:$0xff] %v598
    %615 = vst [vmem:[%s4 + $0x70] sm:$0xff] %v599
    %616 = vst [vmem:[%s4 + $0x78] sm:$0xff] %v600
  $region25: #{gcn_forward.3} parent=0 // pred_fallthru
    _
  // Predicated region
  $region26: #{gcn_forward.3} parent=0 // pred_check
    _
  $region27: #{gcn_forward.3} parent=0 // pred_check_branch
    %618 = sbr.rel (0) target = $region29
  $region28: #{gcn_forward.3} parent=0 // pred_region
    _
  $region29: #{gcn_forward.3} parent=0 // pred_fallthru
    _
  // Predicated region
  $region30: #{gcn_forward.3} parent=0 // pred_check
    _
  $region31: #{gcn_forward.3} parent=0 // pred_check_branch
    %620 = sbr.rel (0) target = $region33
  $region32: #{gcn_forward.3} parent=0 // pred_region
    _
  $region33: #{gcn_forward.3} parent=0 // pred_fallthru
    _

// kernel: gcn_forward.2
$region0: #{gcn_forward.2}
  #allocation0 [shape = 'u32[]', space=smem, size = 0x4, offset = 0x4, fixed_abs, tag = 'smem constant byte address 0x4 - core index']
  #allocation1 [shape = 'u32[72,128]{1,0:T(1,128)}', space=vmem, size = 0x9000, scoped, tag = 'internal scratch']
  #allocation2 [shape = 'f32[128,128]{1,0:T(8,128)}', space=vmem, size = 0x10000, scoped, tag = 'scratch operand']
  %s0 = inlined_call_operand.vmem [shape: bf16[128,128], index: 0, kind: input, shape index: {}]
  %s1 = inlined_call_operand.vmem [shape: bf16[128,128], index: 1, kind: input, shape index: {}]
  %s2 = inlined_call_operand.vmem [shape: bf16[128,128], index: 2, kind: input, shape index: {}]
  %s3 = inlined_call_operand.vmem [shape: f32[1,128], index: 3, kind: input, shape index: {}]
  %s4 = inlined_call_operand.vmem [shape: bf16[128,128], index: 4, kind: output, shape index: {}]
  %s5 = sld [smem:[#allocation0]]
  $region34: #{gcn_forward.2} parent=0
    _
  %s7 = ssub.s32 1, %s5
  %s8 = scalar_select 0, %s7, %s5
  // Predicated region
  $region2: #{gcn_forward.2} parent=0 // pred_check
    _
  $region3: #{gcn_forward.2} parent=0 // pred_check_branch
    %10 = sbr.rel (0) target = $region5
  $region4: #{gcn_forward.2} parent=0 // pred_region
    _
  $region5: #{gcn_forward.2} parent=0 // pred_fallthru
    _
  // Predicated region
  $region6: #{gcn_forward.2} parent=0 // pred_check
    _
  $region7: #{gcn_forward.2} parent=0 // pred_check_branch
    %12 = sbr.rel (0) target = $region9
  $region8: #{gcn_forward.2} parent=0 // pred_region
    _
  $region9: #{gcn_forward.2} parent=0 // pred_fallthru
    _
  // Predicated region
  $region10: #{gcn_forward.2} parent=0 // pred_check
    _
  $region11: #{gcn_forward.2} parent=0 // pred_check_branch
    %14 = sbr.rel (0) target = $region13
  $region12: #{gcn_forward.2} parent=0 // pred_region
    _
  $region13: #{gcn_forward.2} parent=0 // pred_fallthru
    _
  // Predicated region
  $region14: #{gcn_forward.2} parent=0 // pred_check
    _
  $region15: #{gcn_forward.2} parent=0 // pred_check_branch
    %16 = sbr.rel (0) target = $region17
  $region16: #{gcn_forward.2} parent=0 // pred_region
    _
  $region17: #{gcn_forward.2} parent=0 // pred_fallthru
    _
  %p17 = scmp.eq.s32.totalorder 0, 0
  // Predicated region
  $region18: #{gcn_forward.2} parent=0 // pred_check
    %p18 = pneg %p17
  $region19: #{gcn_forward.2} parent=0 // pred_check_branch
    %20 = sbr.rel (%p18) target = $region21
  $region20: #{gcn_forward.2} parent=0 // pred_region
    %21 = vst [vmem:[#allocation2] sm:$0xff] 0.0
    %22 = vst [vmem:[#allocation2 + $0x8] sm:$0xff] 0.0
    %23 = vst [vmem:[#allocation2 + $0x10] sm:$0xff] 0.0
    %24 = vst [vmem:[#allocation2 + $0x18] sm:$0xff] 0.0
    %25 = vst [vmem:[#allocation2 + $0x20] sm:$0xff] 0.0
    %26 = vst [vmem:[#allocation2 + $0x28] sm:$0xff] 0.0
    %27 = vst [vmem:[#allocation2 + $0x30] sm:$0xff] 0.0
    %28 = vst [vmem:[#allocation2 + $0x38] sm:$0xff] 0.0
    %29 = vst [vmem:[#allocation2 + $0x40] sm:$0xff] 0.0
    %30 = vst [vmem:[#allocation2 + $0x48] sm:$0xff] 0.0
    %31 = vst [vmem:[#allocation2 + $0x50] sm:$0xff] 0.0
    %32 = vst [vmem:[#allocation2 + $0x58] sm:$0xff] 0.0
    %33 = vst [vmem:[#allocation2 + $0x60] sm:$0xff] 0.0
    %34 = vst [vmem:[#allocation2 + $0x68] sm:$0xff] 0.0
    %35 = vst [vmem:[#allocation2 + $0x70] sm:$0xff] 0.0
    %36 = vst [vmem:[#allocation2 + $0x78] sm:$0xff] 0.0
  $region21: #{gcn_forward.2} parent=0 // pred_fallthru
    _
  %v37 = vld [vmem:[%s1] sm:$0xf]
  %v38 = vld [vmem:[%s1 + $0x4] sm:$0xf]
  %v39 = vld [vmem:[%s1 + $0x8] sm:$0xf]
  %v40 = vld [vmem:[%s1 + $0xc] sm:$0xf]
  %v41 = vld [vmem:[%s1 + $0x10] sm:$0xf]
  %v42 = vld [vmem:[%s1 + $0x14] sm:$0xf]
  %v43 = vld [vmem:[%s1 + $0x18] sm:$0xf]
  %v44 = vld [vmem:[%s1 + $0x1c] sm:$0xf]
  %v45 = vld [vmem:[%s1 + $0x20] sm:$0xf]
  %v46 = vld [vmem:[%s1 + $0x24] sm:$0xf]
  %v47 = vld [vmem:[%s1 + $0x28] sm:$0xf]
  %v48 = vld [vmem:[%s1 + $0x2c] sm:$0xf]
  %v49 = vld [vmem:[%s1 + $0x30] sm:$0xf]
  %v50 = vld [vmem:[%s1 + $0x34] sm:$0xf]
  %v51 = vld [vmem:[%s1 + $0x38] sm:$0xf]
  %v52 = vld [vmem:[%s1 + $0x3c] sm:$0xf]
  %v53 = vld [vmem:[%s2] sm:$0xf]
  %v54 = vld [vmem:[%s2 + $0x4] sm:$0xf]
  %v55 = vld [vmem:[%s2 + $0x8] sm:$0xf]
  %v56 = vld [vmem:[%s2 + $0xc] sm:$0xf]
  %v57 = vld [vmem:[%s2 + $0x10] sm:$0xf]
  %v58 = vld [vmem:[%s2 + $0x14] sm:$0xf]
  %v59 = vld [vmem:[%s2 + $0x18] sm:$0xf]
  %v60 = vld [vmem:[%s2 + $0x1c] sm:$0xf]
  %v61 = vld [vmem:[%s2 + $0x20] sm:$0xf]
  %v62 = vld [vmem:[%s2 + $0x24] sm:$0xf]
  %v63 = vld [vmem:[%s2 + $0x28] sm:$0xf]
  %v64 = vld [vmem:[%s2 + $0x2c] sm:$0xf]
  %v65 = vld [vmem:[%s2 + $0x30] sm:$0xf]
  %v66 = vld [vmem:[%s2 + $0x34] sm:$0xf]
  %v67 = vld [vmem:[%s2 + $0x38] sm:$0xf]
  %v68 = vld [vmem:[%s2 + $0x3c] sm:$0xf]
  %v85 = vunpack.c.l.b16 %v37
  %v86 = vunpack.c.l.b16 %v38
  %v87 = vunpack.c.l.b16 %v39
  %v88 = vunpack.c.l.b16 %v40
  %v89 = vunpack.c.l.b16 %v41
  %v90 = vunpack.c.l.b16 %v42
  %v91 = vunpack.c.l.b16 %v43
  %v92 = vunpack.c.l.b16 %v44
  %v93 = vunpack.c.l.b16 %v45
  %v94 = vunpack.c.l.b16 %v46
  %v95 = vunpack.c.l.b16 %v47
  %v96 = vunpack.c.l.b16 %v48
  %v97 = vunpack.c.l.b16 %v49
  %v98 = vunpack.c.l.b16 %v50
  %v99 = vunpack.c.l.b16 %v51
  %v100 = vunpack.c.l.b16 %v52
  %v101 = vpack.c.b16 %v86, %v85
  %v102 = vpack.c.b16 %v88, %v87
  %v103 = vpack.c.b16 %v90, %v89
  %v104 = vpack.c.b16 %v92, %v91
  %v105 = vpack.c.b16 %v94, %v93
  %v106 = vpack.c.b16 %v96, %v95
  %v107 = vpack.c.b16 %v98, %v97
  %v108 = vpack.c.b16 %v100, %v99
  %v133 = vunpack.c.l.b16 %v53
  %v134 = vunpack.c.l.b16 %v54
  %v135 = vunpack.c.l.b16 %v55
  %v136 = vunpack.c.l.b16 %v56
  %v137 = vunpack.c.l.b16 %v57
  %v138 = vunpack.c.l.b16 %v58
  %v139 = vunpack.c.l.b16 %v59
  %v140 = vunpack.c.l.b16 %v60
  %v141 = vunpack.c.l.b16 %v61
  %v142 = vunpack.c.l.b16 %v62
  %v143 = vunpack.c.l.b16 %v63
  %v144 = vunpack.c.l.b16 %v64
  %v145 = vunpack.c.l.b16 %v65
  %v146 = vunpack.c.l.b16 %v66
  %v147 = vunpack.c.l.b16 %v67
  %v148 = vunpack.c.l.b16 %v68
  %v149 = vpack.c.b16 %v134, %v133
  %v150 = vpack.c.b16 %v136, %v135
  %v151 = vpack.c.b16 %v138, %v137
  %v152 = vpack.c.b16 %v140, %v139
  %v153 = vpack.c.b16 %v142, %v141
  %v154 = vpack.c.b16 %v144, %v143
  %v155 = vpack.c.b16 %v146, %v145
  %v156 = vpack.c.b16 %v148, %v147
  %165 = vmatpush.bf16.msra.mxu0 %v156
  %166 = vmatpush.bf16.msra.mxu0 %v155
  %167 = vmatpush.bf16.msra.mxu0 %v154
  %168 = vmatpush.bf16.msra.mxu0 %v153
  %169 = vmatpush.bf16.msra.mxu0 %v152
  %170 = vmatpush.bf16.msra.mxu0 %v151
  %171 = vmatpush.bf16.msra.mxu0 %v150
  %172 = vmatpush.bf16.msra.mxu0 %v149
  %173 = vmatmul.bf16.gmra.mxu0 %v101
  %v174 = vpop.f32.mrf.mxu0
  %v175 = vadd.f32 0.0, %v174
  %v176 = vpop.f32.mrf.mxu0
  %v177 = vadd.f32 0.0, %v176
  %178 = vmatmul.bf16.gmra.mxu0 %v102
  %v179 = vpop.f32.mrf.mxu0
  %v180 = vadd.f32 0.0, %v179
  %v181 = vpop.f32.mrf.mxu0
  %v182 = vadd.f32 0.0, %v181
  %183 = vmatmul.bf16.gmra.mxu0 %v103
  %v184 = vpop.f32.mrf.mxu0
  %v185 = vadd.f32 0.0, %v184
  %v186 = vpop.f32.mrf.mxu0
  %v187 = vadd.f32 0.0, %v186
  %188 = vmatmul.bf16.gmra.mxu0 %v104
  %v189 = vpop.f32.mrf.mxu0
  %v190 = vadd.f32 0.0, %v189
  %v191 = vpop.f32.mrf.mxu0
  %v192 = vadd.f32 0.0, %v191
  %193 = vmatmul.bf16.gmra.mxu0 %v105
  %v194 = vpop.f32.mrf.mxu0
  %v195 = vadd.f32 0.0, %v194
  %v196 = vpop.f32.mrf.mxu0
  %v197 = vadd.f32 0.0, %v196
  %198 = vmatmul.bf16.gmra.mxu0 %v106
  %v199 = vpop.f32.mrf.mxu0
  %v200 = vadd.f32 0.0, %v199
  %v201 = vpop.f32.mrf.mxu0
  %v202 = vadd.f32 0.0, %v201
  %203 = vmatmul.bf16.gmra.mxu0 %v107
  %v204 = vpop.f32.mrf.mxu0
  %v205 = vadd.f32 0.0, %v204
  %v206 = vpop.f32.mrf.mxu0
  %v207 = vadd.f32 0.0, %v206
  %208 = vmatmul.bf16.gmra.mxu0 %v108
  %v209 = vpop.f32.mrf.mxu0
  %v210 = vadd.f32 0.0, %v209
  %v211 = vpop.f32.mrf.mxu0
  %v212 = vadd.f32 0.0, %v211
  %213 = vdwg.mxu0
  %v214 = vpack.c.bf16 %v177, %v175
  %v215 = vpack.c.bf16 %v182, %v180
  %v216 = vpack.c.bf16 %v187, %v185
  %v217 = vpack.c.bf16 %v192, %v190
  %v218 = vpack.c.bf16 %v197, %v195
  %v219 = vpack.c.bf16 %v202, %v200
  %v220 = vpack.c.bf16 %v207, %v205
  %v221 = vpack.c.bf16 %v212, %v210
  %v222 = vld [vmem:[#allocation2] sm:$0xff]
  %v223 = vld [vmem:[#allocation2 + $0x8] sm:$0xff]
  %v224 = vld [vmem:[#allocation2 + $0x10] sm:$0xff]
  %v225 = vld [vmem:[#allocation2 + $0x18] sm:$0xff]
  %v226 = vld [vmem:[#allocation2 + $0x20] sm:$0xff]
  %v227 = vld [vmem:[#allocation2 + $0x28] sm:$0xff]
  %v228 = vld [vmem:[#allocation2 + $0x30] sm:$0xff]
  %v229 = vld [vmem:[#allocation2 + $0x38] sm:$0xff]
  %v230 = vld [vmem:[#allocation2 + $0x40] sm:$0xff]
  %v231 = vld [vmem:[#allocation2 + $0x48] sm:$0xff]
  %v232 = vld [vmem:[#allocation2 + $0x50] sm:$0xff]
  %v233 = vld [vmem:[#allocation2 + $0x58] sm:$0xff]
  %v234 = vld [vmem:[#allocation2 + $0x60] sm:$0xff]
  %v235 = vld [vmem:[#allocation2 + $0x68] sm:$0xff]
  %v236 = vld [vmem:[#allocation2 + $0x70] sm:$0xff]
  %v237 = vld [vmem:[#allocation2 + $0x78] sm:$0xff]
  %v238 = vld [vmem:[%s0] sm:$0xf]
  %v239 = vld [vmem:[%s0 + $0x4] sm:$0xf]
  %v240 = vld [vmem:[%s0 + $0x8] sm:$0xf]
  %v241 = vld [vmem:[%s0 + $0xc] sm:$0xf]
  %v242 = vld [vmem:[%s0 + $0x10] sm:$0xf]
  %v243 = vld [vmem:[%s0 + $0x14] sm:$0xf]
  %v244 = vld [vmem:[%s0 + $0x18] sm:$0xf]
  %v245 = vld [vmem:[%s0 + $0x1c] sm:$0xf]
  %v246 = vld [vmem:[%s0 + $0x20] sm:$0xf]
  %v247 = vld [vmem:[%s0 + $0x24] sm:$0xf]
  %v248 = vld [vmem:[%s0 + $0x28] sm:$0xf]
  %v249 = vld [vmem:[%s0 + $0x2c] sm:$0xf]
  %v250 = vld [vmem:[%s0 + $0x30] sm:$0xf]
  %v251 = vld [vmem:[%s0 + $0x34] sm:$0xf]
  %v252 = vld [vmem:[%s0 + $0x38] sm:$0xf]
  %v253 = vld [vmem:[%s0 + $0x3c] sm:$0xf]
  %v270 = vunpack.c.l.b16 %v238
  %v271 = vunpack.c.l.b16 %v239
  %v272 = vunpack.c.l.b16 %v240
  %v273 = vunpack.c.l.b16 %v241
  %v274 = vunpack.c.l.b16 %v242
  %v275 = vunpack.c.l.b16 %v243
  %v276 = vunpack.c.l.b16 %v244
  %v277 = vunpack.c.l.b16 %v245
  %v278 = vunpack.c.l.b16 %v246
  %v279 = vunpack.c.l.b16 %v247
  %v280 = vunpack.c.l.b16 %v248
  %v281 = vunpack.c.l.b16 %v249
  %v282 = vunpack.c.l.b16 %v250
  %v283 = vunpack.c.l.b16 %v251
  %v284 = vunpack.c.l.b16 %v252
  %v285 = vunpack.c.l.b16 %v253
  %v286 = vpack.c.b16 %v271, %v270
  %v287 = vpack.c.b16 %v273, %v272
  %v288 = vpack.c.b16 %v275, %v274
  %v289 = vpack.c.b16 %v277, %v276
  %v290 = vpack.c.b16 %v279, %v278
  %v291 = vpack.c.b16 %v281, %v280
  %v292 = vpack.c.b16 %v283, %v282
  %v293 = vpack.c.b16 %v285, %v284
  %302 = vmatpush.bf16.msra.mxu0 %v221
  %303 = vmatpush.bf16.msra.mxu0 %v220
  %304 = vmatpush.bf16.msra.mxu0 %v219
  %305 = vmatpush.bf16.msra.mxu0 %v218
  %306 = vmatpush.bf16.msra.mxu0 %v217
  %307 = vmatpush.bf16.msra.mxu0 %v216
  %308 = vmatpush.bf16.msra.mxu0 %v215
  %309 = vmatpush.bf16.msra.mxu0 %v214
  %310 = vmatmul.bf16.gmra.mxu0 %v286
  %v311 = vpop.f32.mrf.mxu0
  %v312 = vadd.f32 0.0, %v311
  %v313 = vpop.f32.mrf.mxu0
  %v314 = vadd.f32 0.0, %v313
  %315 = vmatmul.bf16.gmra.mxu0 %v287
  %v316 = vpop.f32.mrf.mxu0
  %v317 = vadd.f32 0.0, %v316
  %v318 = vpop.f32.mrf.mxu0
  %v319 = vadd.f32 0.0, %v318
  %320 = vmatmul.bf16.gmra.mxu0 %v288
  %v321 = vpop.f32.mrf.mxu0
  %v322 = vadd.f32 0.0, %v321
  %v323 = vpop.f32.mrf.mxu0
  %v324 = vadd.f32 0.0, %v323
  %325 = vmatmul.bf16.gmra.mxu0 %v289
  %v326 = vpop.f32.mrf.mxu0
  %v327 = vadd.f32 0.0, %v326
  %v328 = vpop.f32.mrf.mxu0
  %v329 = vadd.f32 0.0, %v328
  %330 = vmatmul.bf16.gmra.mxu0 %v290
  %v331 = vpop.f32.mrf.mxu0
  %v332 = vadd.f32 0.0, %v331
  %v333 = vpop.f32.mrf.mxu0
  %v334 = vadd.f32 0.0, %v333
  %335 = vmatmul.bf16.gmra.mxu0 %v291
  %v336 = vpop.f32.mrf.mxu0
  %v337 = vadd.f32 0.0, %v336
  %v338 = vpop.f32.mrf.mxu0
  %v339 = vadd.f32 0.0, %v338
  %340 = vmatmul.bf16.gmra.mxu0 %v292
  %v341 = vpop.f32.mrf.mxu0
  %v342 = vadd.f32 0.0, %v341
  %v343 = vpop.f32.mrf.mxu0
  %v344 = vadd.f32 0.0, %v343
  %345 = vmatmul.bf16.gmra.mxu0 %v293
  %v346 = vpop.f32.mrf.mxu0
  %v347 = vadd.f32 0.0, %v346
  %v348 = vpop.f32.mrf.mxu0
  %v349 = vadd.f32 0.0, %v348
  %350 = vdwg.mxu0
  %v351 = vadd.f32 %v222, %v312
  %v352 = vadd.f32 %v223, %v314
  %v353 = vadd.f32 %v224, %v317
  %v354 = vadd.f32 %v225, %v319
  %v355 = vadd.f32 %v226, %v322
  %v356 = vadd.f32 %v227, %v324
  %v357 = vadd.f32 %v228, %v327
  %v358 = vadd.f32 %v229, %v329
  %v359 = vadd.f32 %v230, %v332
  %v360 = vadd.f32 %v231, %v334
  %v361 = vadd.f32 %v232, %v337
  %v362 = vadd.f32 %v233, %v339
  %v363 = vadd.f32 %v234, %v342
  %v364 = vadd.f32 %v235, %v344
  %v365 = vadd.f32 %v236, %v347
  %v366 = vadd.f32 %v237, %v349
  %367 = vst [vmem:[#allocation2] sm:$0xff] %v351
  %368 = vst [vmem:[#allocation2 + $0x8] sm:$0xff] %v352
  %369 = vst [vmem:[#allocation2 + $0x10] sm:$0xff] %v353
  %370 = vst [vmem:[#allocation2 + $0x18] sm:$0xff] %v354
  %371 = vst [vmem:[#allocation2 + $0x20] sm:$0xff] %v355
  %372 = vst [vmem:[#allocation2 + $0x28] sm:$0xff] %v356
  %373 = vst [vmem:[#allocation2 + $0x30] sm:$0xff] %v357
  %374 = vst [vmem:[#allocation2 + $0x38] sm:$0xff] %v358
  %375 = vst [vmem:[#allocation2 + $0x40] sm:$0xff] %v359
  %376 = vst [vmem:[#allocation2 + $0x48] sm:$0xff] %v360
  %377 = vst [vmem:[#allocation2 + $0x50] sm:$0xff] %v361
  %378 = vst [vmem:[#allocation2 + $0x58] sm:$0xff] %v362
  %379 = vst [vmem:[#allocation2 + $0x60] sm:$0xff] %v363
  %380 = vst [vmem:[#allocation2 + $0x68] sm:$0xff] %v364
  %381 = vst [vmem:[#allocation2 + $0x70] sm:$0xff] %v365
  %382 = vst [vmem:[#allocation2 + $0x78] sm:$0xff] %v366
  // Predicated region
  $region22: #{gcn_forward.2} parent=0 // pred_check
    %p383 = pneg %p17
  $region23: #{gcn_forward.2} parent=0 // pred_check_branch
    %385 = sbr.rel (%p383) target = $region25
  $region24: #{gcn_forward.2} parent=0 // pred_region
    %v386 = vld [vmem:[#allocation2] sm:$0xff]
    %v387 = vld [vmem:[#allocation2 + $0x8] sm:$0xff]
    %v388 = vld [vmem:[#allocation2 + $0x10] sm:$0xff]
    %v389 = vld [vmem:[#allocation2 + $0x18] sm:$0xff]
    %v390 = vld [vmem:[#allocation2 + $0x20] sm:$0xff]
    %v391 = vld [vmem:[#allocation2 + $0x28] sm:$0xff]
    %v392 = vld [vmem:[#allocation2 + $0x30] sm:$0xff]
    %v393 = vld [vmem:[#allocation2 + $0x38] sm:$0xff]
    %v394 = vld [vmem:[#allocation2 + $0x40] sm:$0xff]
    %v395 = vld [vmem:[#allocation2 + $0x48] sm:$0xff]
    %v396 = vld [vmem:[#allocation2 + $0x50] sm:$0xff]
    %v397 = vld [vmem:[#allocation2 + $0x58] sm:$0xff]
    %v398 = vld [vmem:[#allocation2 + $0x60] sm:$0xff]
    %v399 = vld [vmem:[#allocation2 + $0x68] sm:$0xff]
    %v400 = vld [vmem:[#allocation2 + $0x70] sm:$0xff]
    %v401 = vld [vmem:[#allocation2 + $0x78] sm:$0xff]
    %v402 = vld [vmem:[%s3] sm:$0x1]
    %v404 = vperm.slane %v402, 0
    %v406 = vadd.f32 %v386, %v404
    %v407 = vadd.f32 %v387, %v404
    %v408 = vadd.f32 %v388, %v404
    %v409 = vadd.f32 %v389, %v404
    %v410 = vadd.f32 %v390, %v404
    %v411 = vadd.f32 %v391, %v404
    %v412 = vadd.f32 %v392, %v404
    %v413 = vadd.f32 %v393, %v404
    %v414 = vadd.f32 %v394, %v404
    %v415 = vadd.f32 %v395, %v404
    %v416 = vadd.f32 %v396, %v404
    %v417 = vadd.f32 %v397, %v404
    %v418 = vadd.f32 %v398, %v404
    %v419 = vadd.f32 %v399, %v404
    %v420 = vadd.f32 %v400, %v404
    %v421 = vadd.f32 %v401, %v404
    %v422 = vmax.f32 %v406, 0.0
    %v423 = vmax.f32 %v407, 0.0
    %v424 = vmax.f32 %v408, 0.0
    %v425 = vmax.f32 %v409, 0.0
    %v426 = vmax.f32 %v410, 0.0
    %v427 = vmax.f32 %v411, 0.0
    %v428 = vmax.f32 %v412, 0.0
    %v429 = vmax.f32 %v413, 0.0
    %v430 = vmax.f32 %v414, 0.0
    %v431 = vmax.f32 %v415, 0.0
    %v432 = vmax.f32 %v416, 0.0
    %v433 = vmax.f32 %v417, 0.0
    %v434 = vmax.f32 %v418, 0.0
    %v435 = vmax.f32 %v419, 0.0
    %v436 = vmax.f32 %v420, 0.0
    %v437 = vmax.f32 %v421, 0.0
    %v438 = vpack.c.bf16 %v422, %v422
    %v439 = vpack.c.bf16 %v423, %v423
    %v440 = vpack.c.bf16 %v424, %v424
    %v441 = vpack.c.bf16 %v425, %v425
    %v442 = vpack.c.bf16 %v426, %v426
    %v443 = vpack.c.bf16 %v427, %v427
    %v444 = vpack.c.bf16 %v428, %v428
    %v445 = vpack.c.bf16 %v429, %v429
    %v446 = vpack.c.bf16 %v430, %v430
    %v447 = vpack.c.bf16 %v431, %v431
    %v448 = vpack.c.bf16 %v432, %v432
    %v449 = vpack.c.bf16 %v433, %v433
    %v450 = vpack.c.bf16 %v434, %v434
    %v451 = vpack.c.bf16 %v435, %v435
    %v452 = vpack.c.bf16 %v436, %v436
    %v453 = vpack.c.bf16 %v437, %v437
    %454 = vst [vmem:[%s4] sm:$0xf] %v438
    %455 = vst [vmem:[%s4 + $0x4] sm:$0xf] %v439
    %456 = vst [vmem:[%s4 + $0x8] sm:$0xf] %v440
    %457 = vst [vmem:[%s4 + $0xc] sm:$0xf] %v441
    %458 = vst [vmem:[%s4 + $0x10] sm:$0xf] %v442
    %459 = vst [vmem:[%s4 + $0x14] sm:$0xf] %v443
    %460 = vst [vmem:[%s4 + $0x18] sm:$0xf] %v444
    %461 = vst [vmem:[%s4 + $0x1c] sm:$0xf] %v445
    %462 = vst [vmem:[%s4 + $0x20] sm:$0xf] %v446
    %463 = vst [vmem:[%s4 + $0x24] sm:$0xf] %v447
    %464 = vst [vmem:[%s4 + $0x28] sm:$0xf] %v448
    %465 = vst [vmem:[%s4 + $0x2c] sm:$0xf] %v449
    %466 = vst [vmem:[%s4 + $0x30] sm:$0xf] %v450
    %467 = vst [vmem:[%s4 + $0x34] sm:$0xf] %v451
    %468 = vst [vmem:[%s4 + $0x38] sm:$0xf] %v452
    %469 = vst [vmem:[%s4 + $0x3c] sm:$0xf] %v453
  $region25: #{gcn_forward.2} parent=0 // pred_fallthru
    _
  // Predicated region
  $region26: #{gcn_forward.2} parent=0 // pred_check
    _
  $region27: #{gcn_forward.2} parent=0 // pred_check_branch
    %471 = sbr.rel (0) target = $region29
  $region28: #{gcn_forward.2} parent=0 // pred_region
    _
  $region29: #{gcn_forward.2} parent=0 // pred_fallthru
    _
  // Predicated region
  $region30: #{gcn_forward.2} parent=0 // pred_check
    _
  $region31: #{gcn_forward.2} parent=0 // pred_check_branch
    %473 = sbr.rel (0) target = $region33
  $region32: #{gcn_forward.2} parent=0 // pred_region
    _
  $region33: #{gcn_forward.2} parent=0 // pred_fallthru
    _

</llo_original>
